<compile_context>
chip_gen: v5e
topology: v5e:2x2
jax: 0.10.0
libtpu: 0.0.40
codegen_flags: <defaults>
</compile_context>

<pallas_src>
import jax
import jax.numpy as jnp
from jax.experimental import pallas as pl
from jax.experimental.pallas import tpu as pltpu

_LANES = 128               # batch entries per lane row
_MAX_TILE_SUBLANES = 256   # 16*256*128*4 B = 2 MiB block; dbl-buffered in+out = 8 MiB VMEM


def _round_up(n, m):
    return (n + m - 1) // m * m


# ---- 2x2 block helpers: a "matrix" is a 4-tuple (m11, m12, m21, m22) of (ch, 128) planes ----
def _m2_mul(p, q):
    p11, p12, p21, p22 = p
    q11, q12, q21, q22 = q
    return (p11 * q11 + p12 * q21,
            p11 * q12 + p12 * q22,
            p21 * q11 + p22 * q21,
            p21 * q12 + p22 * q22)


def _m2_sub(p, q):
    return tuple(pi - qi for pi, qi in zip(p, q))


def _m2_neg(p):
    return tuple(-pi for pi in p)


def _m2_inv(m):
    a, b, c, d = m
    inv_det = 1.0 / (a * d - b * c)      # exact divide: keeps 1e-4 tolerance safe
    return (d * inv_det, -b * inv_det, -c * inv_det, a * inv_det)


def _make_inverse_kernel(tile_sublanes, chunk_sublanes):
    n_chunks = tile_sublanes // chunk_sublanes

    def kernel(x_ref, o_ref):
        # x_ref / o_ref: (16, tile_sublanes, 128) f32, element-major planes.
        for ci in range(n_chunks):       # static unroll; keeps vreg pressure modest
            lo = ci * chunk_sublanes
            hi = lo + chunk_sublanes

            def e(i, j):
                return x_ref[4 * i + j, lo:hi, :]       # dense (chunk, 128) plane

            a = (e(0, 0), e(0, 1), e(1, 0), e(1, 1))
            b = (e(0, 2), e(0, 3), e(1, 2), e(1, 3))
            c = (e(2, 0), e(2, 1), e(3, 0), e(3, 1))
            d = (e(2, 2), e(2, 3), e(3, 2), e(3, 3))

            a_inv = _m2_inv(a)
            ainv_b = _m2_mul(a_inv, b)                   # reused
            c_ainv = _m2_mul(c, a_inv)                   # reused
            schur = _m2_inv(_m2_sub(d, _m2_mul(c_ainv, b)))
            Bm = _m2_neg(_m2_mul(ainv_b, schur))         # -a_inv b schur
            Cm = _m2_neg(_m2_mul(schur, c_ainv))         # -schur c a_inv
            Am = _m2_sub(a_inv, _m2_mul(Bm, c_ainv))     # a_inv + a_inv b schur c a_inv
            Dm = schur

            rows = (Am[0], Am[1], Bm[0], Bm[1],
                    Am[2], Am[3], Bm[2], Bm[3],
                    Cm[0], Cm[1], Dm[0], Dm[1],
                    Cm[2], Cm[3], Dm[2], Dm[3])
            for k in range(16):                          # dense, unmasked full-width stores
                o_ref[k, lo:hi, :] = rows[k]

    return kernel


def _choose_tiling(batch):
    """Return (S, TS): total sublane rows (multiple of TS) and tile sublane rows."""
    s = _round_up(max(-(-batch // _LANES), 1), 8)
    if s > _MAX_TILE_SUBLANES:
        ts = _MAX_TILE_SUBLANES
        s = _round_up(s, ts)
    elif s >= 16:
        ts = _round_up(s // 2, 8)       # >= 2 grid steps -> splittable across v7x cores
        s = _round_up(s, ts)
    else:
        ts = s
    return s, ts


@jax.jit
def inverse_module(x):
    """x: (B, 4, 4) float32 -> (B, 4, 4) blockwise (Schur) inverse, as in the PyTorch module."""
    B = x.shape[0]
    assert x.shape[1:] == (4, 4)
    x = x.astype(jnp.float32)

    s, ts = _choose_tiling(B)
    b_pad = s * _LANES

    # Inner compute chunk (sublanes per unrolled step): largest of 64/32/16/8 dividing ts.
    chunk = ts
    for c in (64, 32, 16, 8):
        if ts % c == 0:
            chunk = c
            break

    # AoS (B,4,4) -> SoA element-major (16, B_pad); pad extra batch lanes with identity
    # matrices so padded lanes never produce inf/NaN.  Single fused XLA copy under jit.
    x_em = x.reshape(B, 16).T                                   # (16, B)
    if b_pad > B:
        pad = jnp.broadcast_to(jnp.eye(4, dtype=jnp.float32).reshape(16, 1),
                               (16, b_pad - B))
        x_em = jnp.concatenate([x_em, pad], axis=1)
    x_em = x_em.reshape(16, s, _LANES)

    out_em = pl.pallas_call(
        _make_inverse_kernel(ts, chunk),
        out_shape=jax.ShapeDtypeStruct((16, s, _LANES), jnp.float32),
        grid_spec=pltpu.PrefetchScalarGridSpec(
            num_scalar_prefetch=0,
            grid=(s // ts,),
            in_specs=[pl.BlockSpec((16, ts, _LANES), lambda i: (0, i, 0))],
            out_specs=pl.BlockSpec((16, ts, _LANES), lambda i: (0, i, 0)),
        ),
        compiler_params=pltpu.CompilerParams(
            dimension_semantics=("parallel",)),
    )(x_em)

    # SoA (16, B_pad) -> AoS (B, 4, 4)
    return out_em.reshape(16, b_pad)[:, :B].T.reshape(B, 4, 4)


if __name__ == "__main__":
    key0, key1 = jax.random.split(jax.random.PRNGKey(0))

    # Small deterministic test (well-conditioned: diagonally dominant, as the module assumes).
    B = 8
    x = jax.random.normal(key0, (B, 4, 4), dtype=jnp.float32) + 4.0 * jnp.eye(4, dtype=jnp.float32)
    out = jax.block_until_ready(inverse_module(x))
    ref = jnp.linalg.inv(x)
    assert out.shape == (B, 4, 4)
    assert jnp.allclose(out, ref, atol=1e-4, rtol=1e-4), "mismatch vs reference inverse (B=8)"

    # Exercise the multi-tile (grid > 1) and identity-padding path.
    B2 = 1500
    x2 = jax.random.normal(key1, (B2, 4, 4), dtype=jnp.float32) + 6.0 * jnp.eye(4, dtype=jnp.float32)
    out2 = jax.block_until_ready(inverse_module(x2))
    ref2 = jnp.linalg.inv(x2)
    assert jnp.allclose(out2, ref2, atol=1e-4, rtol=1e-4), "mismatch vs reference inverse (B=1500)"

    print("KERNEL_OK")
</pallas_src>

<mosaic_0001>
module attributes {stable_mosaic.version = 11 : i64} {
  func.func @kernel(%arg0: i32, %arg1: memref<16x8x128xf32, #tpu.memory_space<vmem>>, %arg2: memref<16x8x128xf32, #tpu.memory_space<vmem>>) attributes {dimension_semantics = [#tpu.dimension_semantics<parallel>], iteration_bounds = array<i64: 1>, scalar_prefetch = 0 : i64, scratch_operands = 0 : i64, tpu.core_type = #tpu.core_type<tc>, window_params = [{transform_indices = @transform_0, window_bounds = array<i64: 16, 8, 128>}, {transform_indices = @transform_1, window_bounds = array<i64: 16, 8, 128>}]} {
    %c0 = arith.constant 0 : index
    %c0_0 = arith.constant 0 : index
    %c0_1 = arith.constant 0 : index
    %0 = vector.load %arg1[%c0, %c0_0, %c0_1] : memref<16x8x128xf32, #tpu.memory_space<vmem>>, vector<1x8x128xf32>
    %1 = vector.shape_cast %0 : vector<1x8x128xf32> to vector<8x128xf32>
    %c1 = arith.constant 1 : index
    %c0_2 = arith.constant 0 : index
    %c0_3 = arith.constant 0 : index
    %2 = vector.load %arg1[%c1, %c0_2, %c0_3] : memref<16x8x128xf32, #tpu.memory_space<vmem>>, vector<1x8x128xf32>
    %3 = vector.shape_cast %2 : vector<1x8x128xf32> to vector<8x128xf32>
    %c4 = arith.constant 4 : index
    %c0_4 = arith.constant 0 : index
    %c0_5 = arith.constant 0 : index
    %4 = vector.load %arg1[%c4, %c0_4, %c0_5] : memref<16x8x128xf32, #tpu.memory_space<vmem>>, vector<1x8x128xf32>
    %5 = vector.shape_cast %4 : vector<1x8x128xf32> to vector<8x128xf32>
    %c5 = arith.constant 5 : index
    %c0_6 = arith.constant 0 : index
    %c0_7 = arith.constant 0 : index
    %6 = vector.load %arg1[%c5, %c0_6, %c0_7] : memref<16x8x128xf32, #tpu.memory_space<vmem>>, vector<1x8x128xf32>
    %7 = vector.shape_cast %6 : vector<1x8x128xf32> to vector<8x128xf32>
    %c2 = arith.constant 2 : index
    %c0_8 = arith.constant 0 : index
    %c0_9 = arith.constant 0 : index
    %8 = vector.load %arg1[%c2, %c0_8, %c0_9] : memref<16x8x128xf32, #tpu.memory_space<vmem>>, vector<1x8x128xf32>
    %9 = vector.shape_cast %8 : vector<1x8x128xf32> to vector<8x128xf32>
    %c3 = arith.constant 3 : index
    %c0_10 = arith.constant 0 : index
    %c0_11 = arith.constant 0 : index
    %10 = vector.load %arg1[%c3, %c0_10, %c0_11] : memref<16x8x128xf32, #tpu.memory_space<vmem>>, vector<1x8x128xf32>
    %11 = vector.shape_cast %10 : vector<1x8x128xf32> to vector<8x128xf32>
    %c6 = arith.constant 6 : index
    %c0_12 = arith.constant 0 : index
    %c0_13 = arith.constant 0 : index
    %12 = vector.load %arg1[%c6, %c0_12, %c0_13] : memref<16x8x128xf32, #tpu.memory_space<vmem>>, vector<1x8x128xf32>
    %13 = vector.shape_cast %12 : vector<1x8x128xf32> to vector<8x128xf32>
    %c7 = arith.constant 7 : index
    %c0_14 = arith.constant 0 : index
    %c0_15 = arith.constant 0 : index
    %14 = vector.load %arg1[%c7, %c0_14, %c0_15] : memref<16x8x128xf32, #tpu.memory_space<vmem>>, vector<1x8x128xf32>
    %15 = vector.shape_cast %14 : vector<1x8x128xf32> to vector<8x128xf32>
    %c8 = arith.constant 8 : index
    %c0_16 = arith.constant 0 : index
    %c0_17 = arith.constant 0 : index
    %16 = vector.load %arg1[%c8, %c0_16, %c0_17] : memref<16x8x128xf32, #tpu.memory_space<vmem>>, vector<1x8x128xf32>
    %17 = vector.shape_cast %16 : vector<1x8x128xf32> to vector<8x128xf32>
    %c9 = arith.constant 9 : index
    %c0_18 = arith.constant 0 : index
    %c0_19 = arith.constant 0 : index
    %18 = vector.load %arg1[%c9, %c0_18, %c0_19] : memref<16x8x128xf32, #tpu.memory_space<vmem>>, vector<1x8x128xf32>
    %19 = vector.shape_cast %18 : vector<1x8x128xf32> to vector<8x128xf32>
    %c12 = arith.constant 12 : index
    %c0_20 = arith.constant 0 : index
    %c0_21 = arith.constant 0 : index
    %20 = vector.load %arg1[%c12, %c0_20, %c0_21] : memref<16x8x128xf32, #tpu.memory_space<vmem>>, vector<1x8x128xf32>
    %21 = vector.shape_cast %20 : vector<1x8x128xf32> to vector<8x128xf32>
    %c13 = arith.constant 13 : index
    %c0_22 = arith.constant 0 : index
    %c0_23 = arith.constant 0 : index
    %22 = vector.load %arg1[%c13, %c0_22, %c0_23] : memref<16x8x128xf32, #tpu.memory_space<vmem>>, vector<1x8x128xf32>
    %23 = vector.shape_cast %22 : vector<1x8x128xf32> to vector<8x128xf32>
    %c10 = arith.constant 10 : index
    %c0_24 = arith.constant 0 : index
    %c0_25 = arith.constant 0 : index
    %24 = vector.load %arg1[%c10, %c0_24, %c0_25] : memref<16x8x128xf32, #tpu.memory_space<vmem>>, vector<1x8x128xf32>
    %25 = vector.shape_cast %24 : vector<1x8x128xf32> to vector<8x128xf32>
    %c11 = arith.constant 11 : index
    %c0_26 = arith.constant 0 : index
    %c0_27 = arith.constant 0 : index
    %26 = vector.load %arg1[%c11, %c0_26, %c0_27] : memref<16x8x128xf32, #tpu.memory_space<vmem>>, vector<1x8x128xf32>
    %27 = vector.shape_cast %26 : vector<1x8x128xf32> to vector<8x128xf32>
    %c14 = arith.constant 14 : index
    %c0_28 = arith.constant 0 : index
    %c0_29 = arith.constant 0 : index
    %28 = vector.load %arg1[%c14, %c0_28, %c0_29] : memref<16x8x128xf32, #tpu.memory_space<vmem>>, vector<1x8x128xf32>
    %29 = vector.shape_cast %28 : vector<1x8x128xf32> to vector<8x128xf32>
    %c15 = arith.constant 15 : index
    %c0_30 = arith.constant 0 : index
    %c0_31 = arith.constant 0 : index
    %30 = vector.load %arg1[%c15, %c0_30, %c0_31] : memref<16x8x128xf32, #tpu.memory_space<vmem>>, vector<1x8x128xf32>
    %31 = vector.shape_cast %30 : vector<1x8x128xf32> to vector<8x128xf32>
    %32 = arith.mulf %1, %7 : vector<8x128xf32>
    %33 = arith.mulf %3, %5 : vector<8x128xf32>
    %34 = arith.subf %32, %33 : vector<8x128xf32>
    %cst = arith.constant 1.000000e+00 : f32
    %35 = vector.broadcast %cst : f32 to vector<8x128xf32>
    %36 = arith.divf %35, %34 : vector<8x128xf32>
    %37 = arith.mulf %7, %36 : vector<8x128xf32>
    %cst_32 = arith.constant 0.000000e+00 : f32
    %38 = vector.broadcast %cst_32 : f32 to vector<8x128xf32>
    %39 = arith.subf %38, %3 : vector<8x128xf32>
    %40 = arith.mulf %39, %36 : vector<8x128xf32>
    %cst_33 = arith.constant 0.000000e+00 : f32
    %41 = vector.broadcast %cst_33 : f32 to vector<8x128xf32>
    %42 = arith.subf %41, %5 : vector<8x128xf32>
    %43 = arith.mulf %42, %36 : vector<8x128xf32>
    %44 = arith.mulf %1, %36 : vector<8x128xf32>
    %45 = arith.mulf %37, %9 : vector<8x128xf32>
    %46 = arith.mulf %40, %13 : vector<8x128xf32>
    %47 = arith.addf %45, %46 : vector<8x128xf32>
    %48 = arith.mulf %37, %11 : vector<8x128xf32>
    %49 = arith.mulf %40, %15 : vector<8x128xf32>
    %50 = arith.addf %48, %49 : vector<8x128xf32>
    %51 = arith.mulf %43, %9 : vector<8x128xf32>
    %52 = arith.mulf %44, %13 : vector<8x128xf32>
    %53 = arith.addf %51, %52 : vector<8x128xf32>
    %54 = arith.mulf %43, %11 : vector<8x128xf32>
    %55 = arith.mulf %44, %15 : vector<8x128xf32>
    %56 = arith.addf %54, %55 : vector<8x128xf32>
    %57 = arith.mulf %17, %37 : vector<8x128xf32>
    %58 = arith.mulf %19, %43 : vector<8x128xf32>
    %59 = arith.addf %57, %58 : vector<8x128xf32>
    %60 = arith.mulf %17, %40 : vector<8x128xf32>
    %61 = arith.mulf %19, %44 : vector<8x128xf32>
    %62 = arith.addf %60, %61 : vector<8x128xf32>
    %63 = arith.mulf %21, %37 : vector<8x128xf32>
    %64 = arith.mulf %23, %43 : vector<8x128xf32>
    %65 = arith.addf %63, %64 : vector<8x128xf32>
    %66 = arith.mulf %21, %40 : vector<8x128xf32>
    %67 = arith.mulf %23, %44 : vector<8x128xf32>
    %68 = arith.addf %66, %67 : vector<8x128xf32>
    %69 = arith.mulf %59, %9 : vector<8x128xf32>
    %70 = arith.mulf %62, %13 : vector<8x128xf32>
    %71 = arith.addf %69, %70 : vector<8x128xf32>
    %72 = arith.mulf %59, %11 : vector<8x128xf32>
    %73 = arith.mulf %62, %15 : vector<8x128xf32>
    %74 = arith.addf %72, %73 : vector<8x128xf32>
    %75 = arith.mulf %65, %9 : vector<8x128xf32>
    %76 = arith.mulf %68, %13 : vector<8x128xf32>
    %77 = arith.addf %75, %76 : vector<8x128xf32>
    %78 = arith.mulf %65, %11 : vector<8x128xf32>
    %79 = arith.mulf %68, %15 : vector<8x128xf32>
    %80 = arith.addf %78, %79 : vector<8x128xf32>
    %81 = arith.subf %25, %71 : vector<8x128xf32>
    %82 = arith.subf %27, %74 : vector<8x128xf32>
    %83 = arith.subf %29, %77 : vector<8x128xf32>
    %84 = arith.subf %31, %80 : vector<8x128xf32>
    %85 = arith.mulf %81, %84 : vector<8x128xf32>
    %86 = arith.mulf %82, %83 : vector<8x128xf32>
    %87 = arith.subf %85, %86 : vector<8x128xf32>
    %cst_34 = arith.constant 1.000000e+00 : f32
    %88 = vector.broadcast %cst_34 : f32 to vector<8x128xf32>
    %89 = arith.divf %88, %87 : vector<8x128xf32>
    %90 = arith.mulf %84, %89 : vector<8x128xf32>
    %cst_35 = arith.constant 0.000000e+00 : f32
    %91 = vector.broadcast %cst_35 : f32 to vector<8x128xf32>
    %92 = arith.subf %91, %82 : vector<8x128xf32>
    %93 = arith.mulf %92, %89 : vector<8x128xf32>
    %cst_36 = arith.constant 0.000000e+00 : f32
    %94 = vector.broadcast %cst_36 : f32 to vector<8x128xf32>
    %95 = arith.subf %94, %83 : vector<8x128xf32>
    %96 = arith.mulf %95, %89 : vector<8x128xf32>
    %97 = arith.mulf %81, %89 : vector<8x128xf32>
    %98 = arith.mulf %47, %90 : vector<8x128xf32>
    %99 = arith.mulf %50, %96 : vector<8x128xf32>
    %100 = arith.addf %98, %99 : vector<8x128xf32>
    %101 = arith.mulf %47, %93 : vector<8x128xf32>
    %102 = arith.mulf %50, %97 : vector<8x128xf32>
    %103 = arith.addf %101, %102 : vector<8x128xf32>
    %104 = arith.mulf %53, %90 : vector<8x128xf32>
    %105 = arith.mulf %56, %96 : vector<8x128xf32>
    %106 = arith.addf %104, %105 : vector<8x128xf32>
    %107 = arith.mulf %53, %93 : vector<8x128xf32>
    %108 = arith.mulf %56, %97 : vector<8x128xf32>
    %109 = arith.addf %107, %108 : vector<8x128xf32>
    %cst_37 = arith.constant 0.000000e+00 : f32
    %110 = vector.broadcast %cst_37 : f32 to vector<8x128xf32>
    %111 = arith.subf %110, %100 : vector<8x128xf32>
    %cst_38 = arith.constant 0.000000e+00 : f32
    %112 = vector.broadcast %cst_38 : f32 to vector<8x128xf32>
    %113 = arith.subf %112, %103 : vector<8x128xf32>
    %cst_39 = arith.constant 0.000000e+00 : f32
    %114 = vector.broadcast %cst_39 : f32 to vector<8x128xf32>
    %115 = arith.subf %114, %106 : vector<8x128xf32>
    %cst_40 = arith.constant 0.000000e+00 : f32
    %116 = vector.broadcast %cst_40 : f32 to vector<8x128xf32>
    %117 = arith.subf %116, %109 : vector<8x128xf32>
    %118 = arith.mulf %90, %59 : vector<8x128xf32>
    %119 = arith.mulf %93, %65 : vector<8x128xf32>
    %120 = arith.addf %118, %119 : vector<8x128xf32>
    %121 = arith.mulf %90, %62 : vector<8x128xf32>
    %122 = arith.mulf %93, %68 : vector<8x128xf32>
    %123 = arith.addf %121, %122 : vector<8x128xf32>
    %124 = arith.mulf %96, %59 : vector<8x128xf32>
    %125 = arith.mulf %97, %65 : vector<8x128xf32>
    %126 = arith.addf %124, %125 : vector<8x128xf32>
    %127 = arith.mulf %96, %62 : vector<8x128xf32>
    %128 = arith.mulf %97, %68 : vector<8x128xf32>
    %129 = arith.addf %127, %128 : vector<8x128xf32>
    %cst_41 = arith.constant 0.000000e+00 : f32
    %130 = vector.broadcast %cst_41 : f32 to vector<8x128xf32>
    %131 = arith.subf %130, %120 : vector<8x128xf32>
    %cst_42 = arith.constant 0.000000e+00 : f32
    %132 = vector.broadcast %cst_42 : f32 to vector<8x128xf32>
    %133 = arith.subf %132, %123 : vector<8x128xf32>
    %cst_43 = arith.constant 0.000000e+00 : f32
    %134 = vector.broadcast %cst_43 : f32 to vector<8x128xf32>
    %135 = arith.subf %134, %126 : vector<8x128xf32>
    %cst_44 = arith.constant 0.000000e+00 : f32
    %136 = vector.broadcast %cst_44 : f32 to vector<8x128xf32>
    %137 = arith.subf %136, %129 : vector<8x128xf32>
    %138 = arith.mulf %111, %59 : vector<8x128xf32>
    %139 = arith.mulf %113, %65 : vector<8x128xf32>
    %140 = arith.addf %138, %139 : vector<8x128xf32>
    %141 = arith.mulf %111, %62 : vector<8x128xf32>
    %142 = arith.mulf %113, %68 : vector<8x128xf32>
    %143 = arith.addf %141, %142 : vector<8x128xf32>
    %144 = arith.mulf %115, %59 : vector<8x128xf32>
    %145 = arith.mulf %117, %65 : vector<8x128xf32>
    %146 = arith.addf %144, %145 : vector<8x128xf32>
    %147 = arith.mulf %115, %62 : vector<8x128xf32>
    %148 = arith.mulf %117, %68 : vector<8x128xf32>
    %149 = arith.addf %147, %148 : vector<8x128xf32>
    %150 = arith.subf %37, %140 : vector<8x128xf32>
    %151 = arith.subf %40, %143 : vector<8x128xf32>
    %152 = arith.subf %43, %146 : vector<8x128xf32>
    %153 = arith.subf %44, %149 : vector<8x128xf32>
    %c0_45 = arith.constant 0 : index
    %c0_46 = arith.constant 0 : index
    %c0_47 = arith.constant 0 : index
    %154 = vector.load %arg2[%c0_45, %c0_46, %c0_47] : memref<16x8x128xf32, #tpu.memory_space<vmem>>, vector<1x8x128xf32>
    %155 = vector.shape_cast %154 : vector<1x8x128xf32> to vector<8x128xf32>
    %156 = vector.shape_cast %150 : vector<8x128xf32> to vector<1x8x128xf32>
    tpu.vector_store %arg2[%c0_45, %c0_46, %c0_47], %156 {strides = array<i32>} : memref<16x8x128xf32, #tpu.memory_space<vmem>>, vector<1x8x128xf32>,
    %c1_48 = arith.constant 1 : index
    %c0_49 = arith.constant 0 : index
    %c0_50 = arith.constant 0 : index
    %157 = vector.load %arg2[%c1_48, %c0_49, %c0_50] : memref<16x8x128xf32, #tpu.memory_space<vmem>>, vector<1x8x128xf32>
    %158 = vector.shape_cast %157 : vector<1x8x128xf32> to vector<8x128xf32>
    %159 = vector.shape_cast %151 : vector<8x128xf32> to vector<1x8x128xf32>
    tpu.vector_store %arg2[%c1_48, %c0_49, %c0_50], %159 {strides = array<i32>} : memref<16x8x128xf32, #tpu.memory_space<vmem>>, vector<1x8x128xf32>,
    %c2_51 = arith.constant 2 : index
    %c0_52 = arith.constant 0 : index
    %c0_53 = arith.constant 0 : index
    %160 = vector.load %arg2[%c2_51, %c0_52, %c0_53] : memref<16x8x128xf32, #tpu.memory_space<vmem>>, vector<1x8x128xf32>
    %161 = vector.shape_cast %160 : vector<1x8x128xf32> to vector<8x128xf32>
    %162 = vector.shape_cast %111 : vector<8x128xf32> to vector<1x8x128xf32>
    tpu.vector_store %arg2[%c2_51, %c0_52, %c0_53], %162 {strides = array<i32>} : memref<16x8x128xf32, #tpu.memory_space<vmem>>, vector<1x8x128xf32>,
    %c3_54 = arith.constant 3 : index
    %c0_55 = arith.constant 0 : index
    %c0_56 = arith.constant 0 : index
    %163 = vector.load %arg2[%c3_54, %c0_55, %c0_56] : memref<16x8x128xf32, #tpu.memory_space<vmem>>, vector<1x8x128xf32>
    %164 = vector.shape_cast %163 : vector<1x8x128xf32> to vector<8x128xf32>
    %165 = vector.shape_cast %113 : vector<8x128xf32> to vector<1x8x128xf32>
    tpu.vector_store %arg2[%c3_54, %c0_55, %c0_56], %165 {strides = array<i32>} : memref<16x8x128xf32, #tpu.memory_space<vmem>>, vector<1x8x128xf32>,
    %c4_57 = arith.constant 4 : index
    %c0_58 = arith.constant 0 : index
    %c0_59 = arith.constant 0 : index
    %166 = vector.load %arg2[%c4_57, %c0_58, %c0_59] : memref<16x8x128xf32, #tpu.memory_space<vmem>>, vector<1x8x128xf32>
    %167 = vector.shape_cast %166 : vector<1x8x128xf32> to vector<8x128xf32>
    %168 = vector.shape_cast %152 : vector<8x128xf32> to vector<1x8x128xf32>
    tpu.vector_store %arg2[%c4_57, %c0_58, %c0_59], %168 {strides = array<i32>} : memref<16x8x128xf32, #tpu.memory_space<vmem>>, vector<1x8x128xf32>,
    %c5_60 = arith.constant 5 : index
    %c0_61 = arith.constant 0 : index
    %c0_62 = arith.constant 0 : index
    %169 = vector.load %arg2[%c5_60, %c0_61, %c0_62] : memref<16x8x128xf32, #tpu.memory_space<vmem>>, vector<1x8x128xf32>
    %170 = vector.shape_cast %169 : vector<1x8x128xf32> to vector<8x128xf32>
    %171 = vector.shape_cast %153 : vector<8x128xf32> to vector<1x8x128xf32>
    tpu.vector_store %arg2[%c5_60, %c0_61, %c0_62], %171 {strides = array<i32>} : memref<16x8x128xf32, #tpu.memory_space<vmem>>, vector<1x8x128xf32>,
    %c6_63 = arith.constant 6 : index
    %c0_64 = arith.constant 0 : index
    %c0_65 = arith.constant 0 : index
    %172 = vector.load %arg2[%c6_63, %c0_64, %c0_65] : memref<16x8x128xf32, #tpu.memory_space<vmem>>, vector<1x8x128xf32>
    %173 = vector.shape_cast %172 : vector<1x8x128xf32> to vector<8x128xf32>
    %174 = vector.shape_cast %115 : vector<8x128xf32> to vector<1x8x128xf32>
    tpu.vector_store %arg2[%c6_63, %c0_64, %c0_65], %174 {strides = array<i32>} : memref<16x8x128xf32, #tpu.memory_space<vmem>>, vector<1x8x128xf32>,
    %c7_66 = arith.constant 7 : index
    %c0_67 = arith.constant 0 : index
    %c0_68 = arith.constant 0 : index
    %175 = vector.load %arg2[%c7_66, %c0_67, %c0_68] : memref<16x8x128xf32, #tpu.memory_space<vmem>>, vector<1x8x128xf32>
    %176 = vector.shape_cast %175 : vector<1x8x128xf32> to vector<8x128xf32>
    %177 = vector.shape_cast %117 : vector<8x128xf32> to vector<1x8x128xf32>
    tpu.vector_store %arg2[%c7_66, %c0_67, %c0_68], %177 {strides = array<i32>} : memref<16x8x128xf32, #tpu.memory_space<vmem>>, vector<1x8x128xf32>,
    %c8_69 = arith.constant 8 : index
    %c0_70 = arith.constant 0 : index
    %c0_71 = arith.constant 0 : index
    %178 = vector.load %arg2[%c8_69, %c0_70, %c0_71] : memref<16x8x128xf32, #tpu.memory_space<vmem>>, vector<1x8x128xf32>
    %179 = vector.shape_cast %178 : vector<1x8x128xf32> to vector<8x128xf32>
    %180 = vector.shape_cast %131 : vector<8x128xf32> to vector<1x8x128xf32>
    tpu.vector_store %arg2[%c8_69, %c0_70, %c0_71], %180 {strides = array<i32>} : memref<16x8x128xf32, #tpu.memory_space<vmem>>, vector<1x8x128xf32>,
    %c9_72 = arith.constant 9 : index
    %c0_73 = arith.constant 0 : index
    %c0_74 = arith.constant 0 : index
    %181 = vector.load %arg2[%c9_72, %c0_73, %c0_74] : memref<16x8x128xf32, #tpu.memory_space<vmem>>, vector<1x8x128xf32>
    %182 = vector.shape_cast %181 : vector<1x8x128xf32> to vector<8x128xf32>
    %183 = vector.shape_cast %133 : vector<8x128xf32> to vector<1x8x128xf32>
    tpu.vector_store %arg2[%c9_72, %c0_73, %c0_74], %183 {strides = array<i32>} : memref<16x8x128xf32, #tpu.memory_space<vmem>>, vector<1x8x128xf32>,
    %c10_75 = arith.constant 10 : index
    %c0_76 = arith.constant 0 : index
    %c0_77 = arith.constant 0 : index
    %184 = vector.load %arg2[%c10_75, %c0_76, %c0_77] : memref<16x8x128xf32, #tpu.memory_space<vmem>>, vector<1x8x128xf32>
    %185 = vector.shape_cast %184 : vector<1x8x128xf32> to vector<8x128xf32>
    %186 = vector.shape_cast %90 : vector<8x128xf32> to vector<1x8x128xf32>
    tpu.vector_store %arg2[%c10_75, %c0_76, %c0_77], %186 {strides = array<i32>} : memref<16x8x128xf32, #tpu.memory_space<vmem>>, vector<1x8x128xf32>,
    %c11_78 = arith.constant 11 : index
    %c0_79 = arith.constant 0 : index
    %c0_80 = arith.constant 0 : index
    %187 = vector.load %arg2[%c11_78, %c0_79, %c0_80] : memref<16x8x128xf32, #tpu.memory_space<vmem>>, vector<1x8x128xf32>
    %188 = vector.shape_cast %187 : vector<1x8x128xf32> to vector<8x128xf32>
    %189 = vector.shape_cast %93 : vector<8x128xf32> to vector<1x8x128xf32>
    tpu.vector_store %arg2[%c11_78, %c0_79, %c0_80], %189 {strides = array<i32>} : memref<16x8x128xf32, #tpu.memory_space<vmem>>, vector<1x8x128xf32>,
    %c12_81 = arith.constant 12 : index
    %c0_82 = arith.constant 0 : index
    %c0_83 = arith.constant 0 : index
    %190 = vector.load %arg2[%c12_81, %c0_82, %c0_83] : memref<16x8x128xf32, #tpu.memory_space<vmem>>, vector<1x8x128xf32>
    %191 = vector.shape_cast %190 : vector<1x8x128xf32> to vector<8x128xf32>
    %192 = vector.shape_cast %135 : vector<8x128xf32> to vector<1x8x128xf32>
    tpu.vector_store %arg2[%c12_81, %c0_82, %c0_83], %192 {strides = array<i32>} : memref<16x8x128xf32, #tpu.memory_space<vmem>>, vector<1x8x128xf32>,
    %c13_84 = arith.constant 13 : index
    %c0_85 = arith.constant 0 : index
    %c0_86 = arith.constant 0 : index
    %193 = vector.load %arg2[%c13_84, %c0_85, %c0_86] : memref<16x8x128xf32, #tpu.memory_space<vmem>>, vector<1x8x128xf32>
    %194 = vector.shape_cast %193 : vector<1x8x128xf32> to vector<8x128xf32>
    %195 = vector.shape_cast %137 : vector<8x128xf32> to vector<1x8x128xf32>
    tpu.vector_store %arg2[%c13_84, %c0_85, %c0_86], %195 {strides = array<i32>} : memref<16x8x128xf32, #tpu.memory_space<vmem>>, vector<1x8x128xf32>,
    %c14_87 = arith.constant 14 : index
    %c0_88 = arith.constant 0 : index
    %c0_89 = arith.constant 0 : index
    %196 = vector.load %arg2[%c14_87, %c0_88, %c0_89] : memref<16x8x128xf32, #tpu.memory_space<vmem>>, vector<1x8x128xf32>
    %197 = vector.shape_cast %196 : vector<1x8x128xf32> to vector<8x128xf32>
    %198 = vector.shape_cast %96 : vector<8x128xf32> to vector<1x8x128xf32>
    tpu.vector_store %arg2[%c14_87, %c0_88, %c0_89], %198 {strides = array<i32>} : memref<16x8x128xf32, #tpu.memory_space<vmem>>, vector<1x8x128xf32>,
    %c15_90 = arith.constant 15 : index
    %c0_91 = arith.constant 0 : index
    %c0_92 = arith.constant 0 : index
    %199 = vector.load %arg2[%c15_90, %c0_91, %c0_92] : memref<16x8x128xf32, #tpu.memory_space<vmem>>, vector<1x8x128xf32>
    %200 = vector.shape_cast %199 : vector<1x8x128xf32> to vector<8x128xf32>
    %201 = vector.shape_cast %97 : vector<8x128xf32> to vector<1x8x128xf32>
    tpu.vector_store %arg2[%c15_90, %c0_91, %c0_92], %201 {strides = array<i32>} : memref<16x8x128xf32, #tpu.memory_space<vmem>>, vector<1x8x128xf32>,
    return
  }
  func.func @transform_0(%arg0: i32) -> (i32, i32, i32) {
    %c0_i32 = arith.constant 0 : i32
    %c0_i32_0 = arith.constant 0 : i32
    %c0_i32_1 = arith.constant 0 : i32
    return %c0_i32, %arg0, %c0_i32_0 : i32, i32, i32
  }
  func.func @transform_1(%arg0: i32) -> (i32, i32, i32) {
    %c0_i32 = arith.constant 0 : i32
    %c0_i32_0 = arith.constant 0 : i32
    %c0_i32_1 = arith.constant 0 : i32
    return %c0_i32, %arg0, %c0_i32_0 : i32, i32, i32
  }
}

</mosaic_0001>

<llo_original>
// kernel: inverse_module.1
$region0: #{inverse_module.1}
  #allocation0 [shape = 'u32[]', space=smem, size = 0x4, offset = 0x4, fixed_abs, tag = 'smem constant byte address 0x4 - core index']
  #allocation1 [shape = 'u32[72,128]{1,0:T(1,128)}', space=vmem, size = 0x9000, scoped, tag = 'internal scratch']
  %s0 = inlined_call_operand.vmem [shape: f32[16,8,128], index: 0, kind: input, shape index: {}]
  %s1 = inlined_call_operand.vmem [shape: f32[16,8,128], index: 1, kind: output, shape index: {}]
  %s2 = sld [smem:[#allocation0]]
  $region14: #{inverse_module.1} parent=0
    _
  %s4 = ssub.s32 1, %s2
  %s5 = scalar_select 0, %s4, %s2
  // Predicated region
  $region2: #{inverse_module.1} parent=0 // pred_check
    _
  $region3: #{inverse_module.1} parent=0 // pred_check_branch
    %7 = sbr.rel (0) target = $region5
  $region4: #{inverse_module.1} parent=0 // pred_region
    _
  $region5: #{inverse_module.1} parent=0 // pred_fallthru
    _
  %v8 = vld [vmem:[%s0] sm:$0xff]
  %s9 = scalar_lea.vmem %s0, 8
  %v10 = vld [vmem:[%s9] sm:$0xff]
  %s11 = scalar_lea.vmem %s0, 32
  %v12 = vld [vmem:[%s11] sm:$0xff]
  %s13 = scalar_lea.vmem %s0, 40
  %v14 = vld [vmem:[%s13] sm:$0xff]
  %s15 = scalar_lea.vmem %s0, 16
  %v16 = vld [vmem:[%s15] sm:$0xff]
  %s17 = scalar_lea.vmem %s0, 24
  %v18 = vld [vmem:[%s17] sm:$0xff]
  %s19 = scalar_lea.vmem %s0, 48
  %v20 = vld [vmem:[%s19] sm:$0xff]
  %s21 = scalar_lea.vmem %s0, 56
  %v22 = vld [vmem:[%s21] sm:$0xff]
  %s23 = scalar_lea.vmem %s0, 64
  %v24 = vld [vmem:[%s23] sm:$0xff]
  %s25 = scalar_lea.vmem %s0, 72
  %v26 = vld [vmem:[%s25] sm:$0xff]
  %s27 = scalar_lea.vmem %s0, 96
  %v28 = vld [vmem:[%s27] sm:$0xff]
  %s29 = scalar_lea.vmem %s0, 104
  %v30 = vld [vmem:[%s29] sm:$0xff]
  %s31 = scalar_lea.vmem %s0, 80
  %v32 = vld [vmem:[%s31] sm:$0xff]
  %s33 = scalar_lea.vmem %s0, 88
  %v34 = vld [vmem:[%s33] sm:$0xff]
  %s35 = scalar_lea.vmem %s0, 112
  %v36 = vld [vmem:[%s35] sm:$0xff]
  %s37 = scalar_lea.vmem %s0, 120
  %v38 = vld [vmem:[%s37] sm:$0xff]
  %v39 = vmul.f32 %v8, %v14
  %v40 = vmul.f32 %v10, %v12
  %v41 = vsub.f32 %v39, %v40
  %v42 = vrcp.pop %v41
  %v43 = vmul.f32 %v41, %v42
  %v44 = vsub.f32 1.0, %v43
  %v45 = vmul.f32 %v42, %v44
  %v46 = vadd.f32 %v42, %v45
  %vm47 = vweird.f32 %v41
  %vm48 = vweird.f32 %v42
  %vm49 = vmor %vm47, %vm48
  %v50 = vsel %vm49, %v42, %v46
  %v51 = vand.u32 2147483647, %v41
  %vm52 = vcmp.eq.f32.partialorder %v51, 8.507059e+37
  %v53 = vand.u32 %v41, 2147483648
  %v54 = vor.u32 1.1754944e-38, %v53
  %v55 = vsel %vm52, %v54, %v50
  %v56 = vmul.f32 1.0, %v55
  %v57 = vmul.f32 %v14, %v56
  %v58 = vsub.f32 0.0, %v10
  %v59 = vmul.f32 %v58, %v56
  %v60 = vsub.f32 0.0, %v12
  %v61 = vmul.f32 %v60, %v56
  %v62 = vmul.f32 %v8, %v56
  %v63 = vmul.f32 %v57, %v16
  %v64 = vmul.f32 %v59, %v20
  %v65 = vadd.f32 %v63, %v64
  %v66 = vmul.f32 %v57, %v18
  %v67 = vmul.f32 %v59, %v22
  %v68 = vadd.f32 %v66, %v67
  %v69 = vmul.f32 %v61, %v16
  %v70 = vmul.f32 %v62, %v20
  %v71 = vadd.f32 %v69, %v70
  %v72 = vmul.f32 %v61, %v18
  %v73 = vmul.f32 %v62, %v22
  %v74 = vadd.f32 %v72, %v73
  %v75 = vmul.f32 %v24, %v57
  %v76 = vmul.f32 %v26, %v61
  %v77 = vadd.f32 %v75, %v76
  %v78 = vmul.f32 %v24, %v59
  %v79 = vmul.f32 %v26, %v62
  %v80 = vadd.f32 %v78, %v79
  %v81 = vmul.f32 %v28, %v57
  %v82 = vmul.f32 %v30, %v61
  %v83 = vadd.f32 %v81, %v82
  %v84 = vmul.f32 %v28, %v59
  %v85 = vmul.f32 %v30, %v62
  %v86 = vadd.f32 %v84, %v85
  %v87 = vmul.f32 %v77, %v16
  %v88 = vmul.f32 %v80, %v20
  %v89 = vadd.f32 %v87, %v88
  %v90 = vmul.f32 %v77, %v18
  %v91 = vmul.f32 %v80, %v22
  %v92 = vadd.f32 %v90, %v91
  %v93 = vmul.f32 %v83, %v16
  %v94 = vmul.f32 %v86, %v20
  %v95 = vadd.f32 %v93, %v94
  %v96 = vmul.f32 %v83, %v18
  %v97 = vmul.f32 %v86, %v22
  %v98 = vadd.f32 %v96, %v97
  %v99 = vsub.f32 %v32, %v89
  %v100 = vsub.f32 %v34, %v92
  %v101 = vsub.f32 %v36, %v95
  %v102 = vsub.f32 %v38, %v98
  %v103 = vmul.f32 %v99, %v102
  %v104 = vmul.f32 %v100, %v101
  %v105 = vsub.f32 %v103, %v104
  %v106 = vrcp.pop %v105
  %v107 = vmul.f32 %v105, %v106
  %v108 = vsub.f32 1.0, %v107
  %v109 = vmul.f32 %v106, %v108
  %v110 = vadd.f32 %v106, %v109
  %vm111 = vweird.f32 %v105
  %vm112 = vweird.f32 %v106
  %vm113 = vmor %vm111, %vm112
  %v114 = vsel %vm113, %v106, %v110
  %v115 = vand.u32 2147483647, %v105
  %vm116 = vcmp.eq.f32.partialorder %v115, 8.507059e+37
  %v117 = vand.u32 %v105, 2147483648
  %v118 = vor.u32 1.1754944e-38, %v117
  %v119 = vsel %vm116, %v118, %v114
  %v120 = vmul.f32 1.0, %v119
  %v121 = vmul.f32 %v102, %v120
  %v122 = vsub.f32 0.0, %v100
  %v123 = vmul.f32 %v122, %v120
  %v124 = vsub.f32 0.0, %v101
  %v125 = vmul.f32 %v124, %v120
  %v126 = vmul.f32 %v99, %v120
  %v127 = vmul.f32 %v65, %v121
  %v128 = vmul.f32 %v68, %v125
  %v129 = vadd.f32 %v127, %v128
  %v130 = vmul.f32 %v65, %v123
  %v131 = vmul.f32 %v68, %v126
  %v132 = vadd.f32 %v130, %v131
  %v133 = vmul.f32 %v71, %v121
  %v134 = vmul.f32 %v74, %v125
  %v135 = vadd.f32 %v133, %v134
  %v136 = vmul.f32 %v71, %v123
  %v137 = vmul.f32 %v74, %v126
  %v138 = vadd.f32 %v136, %v137
  %v139 = vsub.f32 0.0, %v129
  %v140 = vsub.f32 0.0, %v132
  %v141 = vsub.f32 0.0, %v135
  %v142 = vsub.f32 0.0, %v138
  %v143 = vmul.f32 %v121, %v77
  %v144 = vmul.f32 %v123, %v83
  %v145 = vadd.f32 %v143, %v144
  %v146 = vmul.f32 %v121, %v80
  %v147 = vmul.f32 %v123, %v86
  %v148 = vadd.f32 %v146, %v147
  %v149 = vmul.f32 %v125, %v77
  %v150 = vmul.f32 %v126, %v83
  %v151 = vadd.f32 %v149, %v150
  %v152 = vmul.f32 %v125, %v80
  %v153 = vmul.f32 %v126, %v86
  %v154 = vadd.f32 %v152, %v153
  %v155 = vsub.f32 0.0, %v145
  %v156 = vsub.f32 0.0, %v148
  %v157 = vsub.f32 0.0, %v151
  %v158 = vsub.f32 0.0, %v154
  %v159 = vmul.f32 %v139, %v77
  %v160 = vmul.f32 %v140, %v83
  %v161 = vadd.f32 %v159, %v160
  %v162 = vmul.f32 %v139, %v80
  %v163 = vmul.f32 %v140, %v86
  %v164 = vadd.f32 %v162, %v163
  %v165 = vmul.f32 %v141, %v77
  %v166 = vmul.f32 %v142, %v83
  %v167 = vadd.f32 %v165, %v166
  %v168 = vmul.f32 %v141, %v80
  %v169 = vmul.f32 %v142, %v86
  %v170 = vadd.f32 %v168, %v169
  %v171 = vsub.f32 %v57, %v161
  %v172 = vsub.f32 %v59, %v164
  %v173 = vsub.f32 %v61, %v167
  %v174 = vsub.f32 %v62, %v170
  %175 = vst [vmem:[%s1] sm:$0xff] %v171
  %s176 = scalar_lea.vmem %s1, 8
  %177 = vst [vmem:[%s176] sm:$0xff] %v172
  %s178 = scalar_lea.vmem %s1, 16
  %179 = vst [vmem:[%s178] sm:$0xff] %v139
  %s180 = scalar_lea.vmem %s1, 24
  %181 = vst [vmem:[%s180] sm:$0xff] %v140
  %s182 = scalar_lea.vmem %s1, 32
  %183 = vst [vmem:[%s182] sm:$0xff] %v173
  %s184 = scalar_lea.vmem %s1, 40
  %185 = vst [vmem:[%s184] sm:$0xff] %v174
  %s186 = scalar_lea.vmem %s1, 48
  %187 = vst [vmem:[%s186] sm:$0xff] %v141
  %s188 = scalar_lea.vmem %s1, 56
  %189 = vst [vmem:[%s188] sm:$0xff] %v142
  %s190 = scalar_lea.vmem %s1, 64
  %191 = vst [vmem:[%s190] sm:$0xff] %v155
  %s192 = scalar_lea.vmem %s1, 72
  %193 = vst [vmem:[%s192] sm:$0xff] %v156
  %s194 = scalar_lea.vmem %s1, 80
  %195 = vst [vmem:[%s194] sm:$0xff] %v121
  %s196 = scalar_lea.vmem %s1, 88
  %197 = vst [vmem:[%s196] sm:$0xff] %v123
  %s198 = scalar_lea.vmem %s1, 96
  %199 = vst [vmem:[%s198] sm:$0xff] %v157
  %s200 = scalar_lea.vmem %s1, 104
  %201 = vst [vmem:[%s200] sm:$0xff] %v158
  %s202 = scalar_lea.vmem %s1, 112
  %203 = vst [vmem:[%s202] sm:$0xff] %v125
  %s204 = scalar_lea.vmem %s1, 120
  %205 = vst [vmem:[%s204] sm:$0xff] %v126
  // Predicated region
  $region6: #{inverse_module.1} parent=0 // pred_check
    _
  $region7: #{inverse_module.1} parent=0 // pred_check_branch
    %207 = sbr.rel (0) target = $region9
  $region8: #{inverse_module.1} parent=0 // pred_region
    _
  $region9: #{inverse_module.1} parent=0 // pred_fallthru
    _
  // Predicated region
  $region10: #{inverse_module.1} parent=0 // pred_check
    _
  $region11: #{inverse_module.1} parent=0 // pred_check_branch
    %209 = sbr.rel (0) target = $region13
  $region12: #{inverse_module.1} parent=0 // pred_region
    _
  $region13: #{inverse_module.1} parent=0 // pred_fallthru
    _

</llo_original>
